<compile_context>
chip_gen: v6e
topology: v6e:2x2x1
jax: 0.10.0
libtpu: 0.0.40
codegen_flags: <defaults>
</compile_context>

<pallas_src>
import functools

import jax
import jax.numpy as jnp
from jax.experimental import pallas as pl
from jax.experimental.pallas import tpu as pltpu

PATCH = 35
HALF = PATCH // 2            # 17
INF = float("inf")
# Log-doubling shift schedule: window sizes 1 -> 2 -> 4 -> 8 -> 16 -> 32 -> 35.
_SHIFTS = (1, 2, 4, 8, 16, 3)


def _shift_down_with_inf(v, s, axis):
    """out[..., j, ...] = v[..., j+s, ...]; vacated tail positions become +inf."""
    tail_shape = list(v.shape)
    tail_shape[axis] = s
    tail = jnp.full(tuple(tail_shape), INF, v.dtype)
    if axis == -1:
        return jnp.concatenate([v[..., s:], tail], axis=-1)
    assert axis == -2
    return jnp.concatenate([v[..., s:, :], tail], axis=-2)


def _sliding_min35(v, axis):
    """Centered 35-tap sliding minimum along `axis` (-1 = lanes, -2 = sublanes).

    Out-of-range positions are skipped (treated as +inf), matching PyTorch
    MaxPool's implicit -inf padding on the negated input.  Entirely value
    resident: no scratch refs, no masked stores; shifts land on the XLU.
    """
    size = v.shape[axis]
    halo_shape = list(v.shape)
    halo_shape[axis] = HALF
    halo = jnp.full(tuple(halo_shape), INF, v.dtype)
    # A left halo of 17 turns the centered window into a left-anchored one.
    run = jnp.concatenate([halo, v], axis=axis)
    for s in _SHIFTS:                              # 6 mins total per axis
        run = jnp.minimum(run, _shift_down_with_inf(run, s, axis))
    if axis == -1:
        return run[..., :size]                     # offset-0 (aligned) slice
    return run[..., :size, :]


def _channel_min3(v, n_chan):
    """Depth-3 running min over consecutive channels: (C, H, W) -> (C-2, H, W)."""
    return jnp.minimum(jnp.minimum(v[:n_chan - 2], v[1:n_chan - 1]), v[2:n_chan])


# ------------------------------ kernels -------------------------------------
def _row_pass_kernel(x_ref, y_ref, zx_ref, zy_ref, *, n_chan):
    """Pass 1: channel min + 35-tap sliding min along W, one H-band (no halo)."""
    zx_ref[0] = _sliding_min35(_channel_min3(x_ref[0], n_chan), axis=-1)
    zy_ref[0] = _sliding_min35(_channel_min3(y_ref[0], n_chan), axis=-1)


def _col_pass_kernel(zx_ref, zy_ref, out_ref):
    """Pass 2: 35-tap sliding min along H + |diff| partial sum, one W-band."""
    dx = _sliding_min35(zx_ref[0], axis=-2)
    dy = _sliding_min35(zy_ref[0], axis=-2)
    diff = jnp.abs(dx.astype(jnp.float32) - dy.astype(jnp.float32))
    out_ref[...] = jnp.broadcast_to(jnp.sum(diff), out_ref.shape)  # lane-dense


def _fused_kernel(x_ref, y_ref, out_ref, *, n_chan):
    """Single-call path (small images / v5e): whole image per grid step."""
    def dc_min(v):
        m = _channel_min3(v, n_chan)
        m = _sliding_min35(m, axis=-1)
        return _sliding_min35(m, axis=-2)

    dx = dc_min(x_ref[0])
    dy = dc_min(y_ref[0])
    diff = jnp.abs(dx.astype(jnp.float32) - dy.astype(jnp.float32))
    out_ref[...] = jnp.broadcast_to(jnp.sum(diff), out_ref.shape)


# ------------------------------ wrapper --------------------------------------
def _pick_band(extent, quantum, target):
    """Largest divisor of `extent` that is a multiple of `quantum` and <= target;
    falls back to the full extent (always a legal block dim)."""
    best = None
    m = quantum
    while m <= min(extent, target):
        if extent % m == 0:
            best = m
        m += quantum
    return extent if best is None else best


def dc_loss(x, y, *, band_h=None, band_w=None, force_two_pass=False):
    n, c, h, w = x.shape
    assert y.shape == x.shape
    assert c >= 3, "need at least 3 channels for the depth-3 pool"

    # min/max are exact in bf16 -> keep the pooling pipeline in the input dtype
    # (halves VMEM / DMA traffic on v6e/v7x for bf16 inputs); |diff| and the
    # reductions always accumulate in f32.
    work_dtype = x.dtype
    y = y.astype(work_dtype)
    isz = jnp.dtype(work_dtype).itemsize
    denom = n * (c - 2) * h * w

    # Rough whole-image VMEM footprint of the fused path (double-buffered
    # inputs + live value temporaries).  Small images fuse (no intermediate
    # HBM round trip, the v5e-friendly choice); large images take the banded
    # two-pass path so per-block VMEM stays bounded.
    fused_bytes = 4 * c * h * w * isz + 10 * (c - 2) * h * w * 4
    use_fused = (not force_two_pass) and fused_bytes <= 32 * 1024 * 1024

    if use_fused:
        partials = pl.pallas_call(
            functools.partial(_fused_kernel, n_chan=c),
            out_shape=jax.ShapeDtypeStruct((n, 8, 128), jnp.float32),
            grid_spec=pltpu.PrefetchScalarGridSpec(
                num_scalar_prefetch=0,
                grid=(n,),
                in_specs=[
                    pl.BlockSpec((1, c, h, w), lambda i: (i, 0, 0, 0)),
                    pl.BlockSpec((1, c, h, w), lambda i: (i, 0, 0, 0)),
                ],
                out_specs=pl.BlockSpec((1, 8, 128), lambda i: (i, 0, 0)),
            ),
            compiler_params=pltpu.CompilerParams(
                dimension_semantics=("parallel",),
                vmem_limit_bytes=48 * 1024 * 1024,
            ),
            cost_estimate=pl.CostEstimate(
                flops=2 * n * (c - 2) * h * w * 16,
                transcendentals=0,
                bytes_accessed=2 * n * c * h * w * isz + n * 8 * 128 * 4,
            ),
        )(x, y)
        return jnp.sum(partials[:, 0, 0]) / denom

    # -------------------- banded two-pass path (large images) ----------------
    bh = band_h if band_h is not None else _pick_band(h, 8, 64)
    bw = band_w if band_w is not None else _pick_band(w, 128, 256)
    assert h % bh == 0 and (bh % 8 == 0 or bh == h), (h, bh)
    assert w % bw == 0 and (bw % 128 == 0 or bw == w), (w, bw)

    # Pass 1: channel min + sliding min along W; banded along H (no halo needed
    # because neither op mixes rows).  Full-width, lane-dense output stores.
    zx, zy = pl.pallas_call(
        functools.partial(_row_pass_kernel, n_chan=c),
        out_shape=(jax.ShapeDtypeStruct((n, c - 2, h, w), work_dtype),
                   jax.ShapeDtypeStruct((n, c - 2, h, w), work_dtype)),
        grid_spec=pltpu.PrefetchScalarGridSpec(
            num_scalar_prefetch=0,
            grid=(n, h // bh),
            in_specs=[
                pl.BlockSpec((1, c, bh, w), lambda i, j: (i, 0, j, 0)),
                pl.BlockSpec((1, c, bh, w), lambda i, j: (i, 0, j, 0)),
            ],
            out_specs=[
                pl.BlockSpec((1, c - 2, bh, w), lambda i, j: (i, 0, j, 0)),
                pl.BlockSpec((1, c - 2, bh, w), lambda i, j: (i, 0, j, 0)),
            ],
        ),
        compiler_params=pltpu.CompilerParams(
            dimension_semantics=("parallel", "parallel"),
            vmem_limit_bytes=32 * 1024 * 1024,
        ),
        cost_estimate=pl.CostEstimate(
            flops=2 * n * (c - 2) * h * w * 8,
            transcendentals=0,
            bytes_accessed=2 * n * (c + (c - 2)) * h * w * isz,
        ),
    )(x, y)

    # Pass 2: sliding min along H + |diff| + per-band partial sums; banded
    # along W (no halo needed because the op does not mix columns).
    nwb = w // bw
    partials = pl.pallas_call(
        _col_pass_kernel,
        out_shape=jax.ShapeDtypeStruct((n, nwb, 8, 128), jnp.float32),
        grid_spec=pltpu.PrefetchScalarGridSpec(
            num_scalar_prefetch=0,
            grid=(n, nwb),
            in_specs=[
                pl.BlockSpec((1, c - 2, h, bw), lambda i, j: (i, 0, 0, j)),
                pl.BlockSpec((1, c - 2, h, bw), lambda i, j: (i, 0, 0, j)),
            ],
            out_specs=pl.BlockSpec((1, 1, 8, 128), lambda i, j: (i, j, 0, 0)),
        ),
        compiler_params=pltpu.CompilerParams(
            dimension_semantics=("parallel", "parallel"),
            vmem_limit_bytes=32 * 1024 * 1024,
        ),
        cost_estimate=pl.CostEstimate(
            flops=2 * n * (c - 2) * h * w * 8,
            transcendentals=0,
            bytes_accessed=2 * n * (c - 2) * h * w * isz + n * nwb * 8 * 128 * 4,
        ),
    )(zx, zy)
    return jnp.sum(partials[:, :, 0, 0]) / denom


# ---------------- pure-JAX reference (for verification only) -----------------
def _dc_ref(x, patch=PATCH):
    half = patch // 2
    neg = -x
    m3 = jnp.maximum(jnp.maximum(neg[:, :-2], neg[:, 1:-1]), neg[:, 2:])
    p = jnp.pad(m3, ((0, 0), (0, 0), (half, half), (half, half)),
                constant_values=-jnp.inf)
    return jax.lax.reduce_window(p, -jnp.inf, jax.lax.max,
                                 (1, 1, patch, patch), (1, 1, 1, 1), "VALID")


def dc_loss_ref(x, y):
    return jnp.mean(jnp.abs(_dc_ref(x) - _dc_ref(y)))


if __name__ == "__main__":
    key = jax.random.PRNGKey(0)
    k1, k2, k3, k4 = jax.random.split(key, 4)

    # Primary small shape (NCHW, as the module expects).
    N, C, H, W = 2, 4, 16, 16
    X = jax.random.uniform(k1, (N, C, H, W), dtype=jnp.float32)
    Y = jax.random.uniform(k2, (N, C, H, W), dtype=jnp.float32)
    ref = jax.block_until_ready(dc_loss_ref(X, Y))

    # Fused single-call path (auto-selected for small images / v5e-style use).
    out_fused = jax.block_until_ready(dc_loss(X, Y))
    assert jnp.allclose(out_fused, ref, rtol=1e-5, atol=1e-5), (out_fused, ref)

    # Banded two-pass path (the large-image / v7x path), forced here.
    out_banded = jax.block_until_ready(
        dc_loss(X, Y, force_two_pass=True, band_h=8))
    assert jnp.allclose(out_banded, ref, rtol=1e-5, atol=1e-5), (out_banded, ref)

    # Exercise W-banding + batch 1 + C == 3 on a slightly wider image.
    X2 = jax.random.uniform(k3, (1, 3, 24, 256), dtype=jnp.float32)
    Y2 = jax.random.uniform(k4, (1, 3, 24, 256), dtype=jnp.float32)
    ref2 = jax.block_until_ready(dc_loss_ref(X2, Y2))
    out2 = jax.block_until_ready(
        dc_loss(X2, Y2, force_two_pass=True, band_h=8, band_w=128))
    assert jnp.allclose(out2, ref2, rtol=1e-5, atol=1e-5), (out2, ref2)

    print("KERNEL_OK")
</pallas_src>

<mosaic_0001>
module attributes {stable_mosaic.version = 11 : i64} {
  func.func @_fused_kernel(%arg0: i32, %arg1: memref<1x4x16x16xf32, #tpu.memory_space<vmem>>, %arg2: memref<1x4x16x16xf32, #tpu.memory_space<vmem>>, %arg3: memref<1x8x128xf32, #tpu.memory_space<vmem>>) attributes {dimension_semantics = [#tpu.dimension_semantics<parallel>], iteration_bounds = array<i64: 2>, scalar_prefetch = 0 : i64, scratch_operands = 0 : i64, tpu.core_type = #tpu.core_type<tc>, window_params = [{transform_indices = @transform_0, window_bounds = array<i64: 1, 4, 16, 16>}, {transform_indices = @transform_1, window_bounds = array<i64: 1, 4, 16, 16>}, {transform_indices = @transform_2, window_bounds = array<i64: 1, 8, 128>}]} {
    %c0 = arith.constant 0 : index
    %c0_0 = arith.constant 0 : index
    %c0_1 = arith.constant 0 : index
    %c0_2 = arith.constant 0 : index
    %0 = vector.load %arg1[%c0, %c0_0, %c0_1, %c0_2] : memref<1x4x16x16xf32, #tpu.memory_space<vmem>>, vector<1x4x16x16xf32>
    %1 = vector.shape_cast %0 : vector<1x4x16x16xf32> to vector<4x16x16xf32>
    %2 = vector.extract_strided_slice %1 {offsets = [0, 0, 0], sizes = [2, 16, 16], strides = [1, 1, 1]} : vector<4x16x16xf32> to vector<2x16x16xf32>
    %3 = vector.extract_strided_slice %1 {offsets = [1, 0, 0], sizes = [2, 16, 16], strides = [1, 1, 1]} : vector<4x16x16xf32> to vector<2x16x16xf32>
    %4 = arith.minimumf %2, %3 : vector<2x16x16xf32>
    %5 = vector.extract_strided_slice %1 {offsets = [2, 0, 0], sizes = [2, 16, 16], strides = [1, 1, 1]} : vector<4x16x16xf32> to vector<2x16x16xf32>
    %6 = arith.minimumf %4, %5 : vector<2x16x16xf32>
    %cst = arith.constant 0x7F800000 : f32
    %7 = vector.broadcast %cst : f32 to vector<2x16x17xf32>
    %8 = tpu.concatenate %7, %6 in 2 : vector<2x16x17xf32>, vector<2x16x16xf32> -> vector<2x16x33xf32>
    %cst_3 = arith.constant 0x7F800000 : f32
    %9 = vector.broadcast %cst_3 : f32 to vector<2x16x1xf32>
    %10 = vector.extract_strided_slice %8 {offsets = [0, 0, 1], sizes = [2, 16, 32], strides = [1, 1, 1]} : vector<2x16x33xf32> to vector<2x16x32xf32>
    %11 = tpu.concatenate %10, %9 in 2 : vector<2x16x32xf32>, vector<2x16x1xf32> -> vector<2x16x33xf32>
    %12 = arith.minimumf %8, %11 : vector<2x16x33xf32>
    %cst_4 = arith.constant 0x7F800000 : f32
    %13 = vector.broadcast %cst_4 : f32 to vector<2x16x2xf32>
    %14 = vector.extract_strided_slice %12 {offsets = [0, 0, 2], sizes = [2, 16, 31], strides = [1, 1, 1]} : vector<2x16x33xf32> to vector<2x16x31xf32>
    %15 = tpu.concatenate %14, %13 in 2 : vector<2x16x31xf32>, vector<2x16x2xf32> -> vector<2x16x33xf32>
    %16 = arith.minimumf %12, %15 : vector<2x16x33xf32>
    %cst_5 = arith.constant 0x7F800000 : f32
    %17 = vector.broadcast %cst_5 : f32 to vector<2x16x4xf32>
    %18 = vector.extract_strided_slice %16 {offsets = [0, 0, 4], sizes = [2, 16, 29], strides = [1, 1, 1]} : vector<2x16x33xf32> to vector<2x16x29xf32>
    %19 = tpu.concatenate %18, %17 in 2 : vector<2x16x29xf32>, vector<2x16x4xf32> -> vector<2x16x33xf32>
    %20 = arith.minimumf %16, %19 : vector<2x16x33xf32>
    %cst_6 = arith.constant 0x7F800000 : f32
    %21 = vector.broadcast %cst_6 : f32 to vector<2x16x8xf32>
    %22 = vector.extract_strided_slice %20 {offsets = [0, 0, 8], sizes = [2, 16, 25], strides = [1, 1, 1]} : vector<2x16x33xf32> to vector<2x16x25xf32>
    %23 = tpu.concatenate %22, %21 in 2 : vector<2x16x25xf32>, vector<2x16x8xf32> -> vector<2x16x33xf32>
    %24 = arith.minimumf %20, %23 : vector<2x16x33xf32>
    %cst_7 = arith.constant 0x7F800000 : f32
    %25 = vector.broadcast %cst_7 : f32 to vector<2x16x16xf32>
    %26 = vector.extract_strided_slice %24 {offsets = [0, 0, 16], sizes = [2, 16, 17], strides = [1, 1, 1]} : vector<2x16x33xf32> to vector<2x16x17xf32>
    %27 = tpu.concatenate %26, %25 in 2 : vector<2x16x17xf32>, vector<2x16x16xf32> -> vector<2x16x33xf32>
    %28 = arith.minimumf %24, %27 : vector<2x16x33xf32>
    %cst_8 = arith.constant 0x7F800000 : f32
    %29 = vector.broadcast %cst_8 : f32 to vector<2x16x3xf32>
    %30 = vector.extract_strided_slice %28 {offsets = [0, 0, 3], sizes = [2, 16, 30], strides = [1, 1, 1]} : vector<2x16x33xf32> to vector<2x16x30xf32>
    %31 = tpu.concatenate %30, %29 in 2 : vector<2x16x30xf32>, vector<2x16x3xf32> -> vector<2x16x33xf32>
    %32 = arith.minimumf %28, %31 : vector<2x16x33xf32>
    %33 = vector.extract_strided_slice %32 {offsets = [0, 0, 0], sizes = [2, 16, 16], strides = [1, 1, 1]} : vector<2x16x33xf32> to vector<2x16x16xf32>
    %cst_9 = arith.constant 0x7F800000 : f32
    %34 = vector.broadcast %cst_9 : f32 to vector<2x17x16xf32>
    %35 = tpu.concatenate %34, %33 in 1 : vector<2x17x16xf32>, vector<2x16x16xf32> -> vector<2x33x16xf32>
    %cst_10 = arith.constant 0x7F800000 : f32
    %36 = vector.broadcast %cst_10 : f32 to vector<2x1x16xf32>
    %37 = vector.extract_strided_slice %35 {offsets = [0, 1, 0], sizes = [2, 32, 16], strides = [1, 1, 1]} : vector<2x33x16xf32> to vector<2x32x16xf32>
    %38 = tpu.concatenate %37, %36 in 1 : vector<2x32x16xf32>, vector<2x1x16xf32> -> vector<2x33x16xf32>
    %39 = arith.minimumf %35, %38 : vector<2x33x16xf32>
    %cst_11 = arith.constant 0x7F800000 : f32
    %40 = vector.broadcast %cst_11 : f32 to vector<2x2x16xf32>
    %41 = vector.extract_strided_slice %39 {offsets = [0, 2, 0], sizes = [2, 31, 16], strides = [1, 1, 1]} : vector<2x33x16xf32> to vector<2x31x16xf32>
    %42 = tpu.concatenate %41, %40 in 1 : vector<2x31x16xf32>, vector<2x2x16xf32> -> vector<2x33x16xf32>
    %43 = arith.minimumf %39, %42 : vector<2x33x16xf32>
    %cst_12 = arith.constant 0x7F800000 : f32
    %44 = vector.broadcast %cst_12 : f32 to vector<2x4x16xf32>
    %45 = vector.extract_strided_slice %43 {offsets = [0, 4, 0], sizes = [2, 29, 16], strides = [1, 1, 1]} : vector<2x33x16xf32> to vector<2x29x16xf32>
    %46 = tpu.concatenate %45, %44 in 1 : vector<2x29x16xf32>, vector<2x4x16xf32> -> vector<2x33x16xf32>
    %47 = arith.minimumf %43, %46 : vector<2x33x16xf32>
    %cst_13 = arith.constant 0x7F800000 : f32
    %48 = vector.broadcast %cst_13 : f32 to vector<2x8x16xf32>
    %49 = vector.extract_strided_slice %47 {offsets = [0, 8, 0], sizes = [2, 25, 16], strides = [1, 1, 1]} : vector<2x33x16xf32> to vector<2x25x16xf32>
    %50 = tpu.concatenate %49, %48 in 1 : vector<2x25x16xf32>, vector<2x8x16xf32> -> vector<2x33x16xf32>
    %51 = arith.minimumf %47, %50 : vector<2x33x16xf32>
    %cst_14 = arith.constant 0x7F800000 : f32
    %52 = vector.broadcast %cst_14 : f32 to vector<2x16x16xf32>
    %53 = vector.extract_strided_slice %51 {offsets = [0, 16, 0], sizes = [2, 17, 16], strides = [1, 1, 1]} : vector<2x33x16xf32> to vector<2x17x16xf32>
    %54 = tpu.concatenate %53, %52 in 1 : vector<2x17x16xf32>, vector<2x16x16xf32> -> vector<2x33x16xf32>
    %55 = arith.minimumf %51, %54 : vector<2x33x16xf32>
    %cst_15 = arith.constant 0x7F800000 : f32
    %56 = vector.broadcast %cst_15 : f32 to vector<2x3x16xf32>
    %57 = vector.extract_strided_slice %55 {offsets = [0, 3, 0], sizes = [2, 30, 16], strides = [1, 1, 1]} : vector<2x33x16xf32> to vector<2x30x16xf32>
    %58 = tpu.concatenate %57, %56 in 1 : vector<2x30x16xf32>, vector<2x3x16xf32> -> vector<2x33x16xf32>
    %59 = arith.minimumf %55, %58 : vector<2x33x16xf32>
    %60 = vector.extract_strided_slice %59 {offsets = [0, 0, 0], sizes = [2, 16, 16], strides = [1, 1, 1]} : vector<2x33x16xf32> to vector<2x16x16xf32>
    %c0_16 = arith.constant 0 : index
    %c0_17 = arith.constant 0 : index
    %c0_18 = arith.constant 0 : index
    %c0_19 = arith.constant 0 : index
    %61 = vector.load %arg2[%c0_16, %c0_17, %c0_18, %c0_19] : memref<1x4x16x16xf32, #tpu.memory_space<vmem>>, vector<1x4x16x16xf32>
    %62 = vector.shape_cast %61 : vector<1x4x16x16xf32> to vector<4x16x16xf32>
    %63 = vector.extract_strided_slice %62 {offsets = [0, 0, 0], sizes = [2, 16, 16], strides = [1, 1, 1]} : vector<4x16x16xf32> to vector<2x16x16xf32>
    %64 = vector.extract_strided_slice %62 {offsets = [1, 0, 0], sizes = [2, 16, 16], strides = [1, 1, 1]} : vector<4x16x16xf32> to vector<2x16x16xf32>
    %65 = arith.minimumf %63, %64 : vector<2x16x16xf32>
    %66 = vector.extract_strided_slice %62 {offsets = [2, 0, 0], sizes = [2, 16, 16], strides = [1, 1, 1]} : vector<4x16x16xf32> to vector<2x16x16xf32>
    %67 = arith.minimumf %65, %66 : vector<2x16x16xf32>
    %cst_20 = arith.constant 0x7F800000 : f32
    %68 = vector.broadcast %cst_20 : f32 to vector<2x16x17xf32>
    %69 = tpu.concatenate %68, %67 in 2 : vector<2x16x17xf32>, vector<2x16x16xf32> -> vector<2x16x33xf32>
    %cst_21 = arith.constant 0x7F800000 : f32
    %70 = vector.broadcast %cst_21 : f32 to vector<2x16x1xf32>
    %71 = vector.extract_strided_slice %69 {offsets = [0, 0, 1], sizes = [2, 16, 32], strides = [1, 1, 1]} : vector<2x16x33xf32> to vector<2x16x32xf32>
    %72 = tpu.concatenate %71, %70 in 2 : vector<2x16x32xf32>, vector<2x16x1xf32> -> vector<2x16x33xf32>
    %73 = arith.minimumf %69, %72 : vector<2x16x33xf32>
    %cst_22 = arith.constant 0x7F800000 : f32
    %74 = vector.broadcast %cst_22 : f32 to vector<2x16x2xf32>
    %75 = vector.extract_strided_slice %73 {offsets = [0, 0, 2], sizes = [2, 16, 31], strides = [1, 1, 1]} : vector<2x16x33xf32> to vector<2x16x31xf32>
    %76 = tpu.concatenate %75, %74 in 2 : vector<2x16x31xf32>, vector<2x16x2xf32> -> vector<2x16x33xf32>
    %77 = arith.minimumf %73, %76 : vector<2x16x33xf32>
    %cst_23 = arith.constant 0x7F800000 : f32
    %78 = vector.broadcast %cst_23 : f32 to vector<2x16x4xf32>
    %79 = vector.extract_strided_slice %77 {offsets = [0, 0, 4], sizes = [2, 16, 29], strides = [1, 1, 1]} : vector<2x16x33xf32> to vector<2x16x29xf32>
    %80 = tpu.concatenate %79, %78 in 2 : vector<2x16x29xf32>, vector<2x16x4xf32> -> vector<2x16x33xf32>
    %81 = arith.minimumf %77, %80 : vector<2x16x33xf32>
    %cst_24 = arith.constant 0x7F800000 : f32
    %82 = vector.broadcast %cst_24 : f32 to vector<2x16x8xf32>
    %83 = vector.extract_strided_slice %81 {offsets = [0, 0, 8], sizes = [2, 16, 25], strides = [1, 1, 1]} : vector<2x16x33xf32> to vector<2x16x25xf32>
    %84 = tpu.concatenate %83, %82 in 2 : vector<2x16x25xf32>, vector<2x16x8xf32> -> vector<2x16x33xf32>
    %85 = arith.minimumf %81, %84 : vector<2x16x33xf32>
    %cst_25 = arith.constant 0x7F800000 : f32
    %86 = vector.broadcast %cst_25 : f32 to vector<2x16x16xf32>
    %87 = vector.extract_strided_slice %85 {offsets = [0, 0, 16], sizes = [2, 16, 17], strides = [1, 1, 1]} : vector<2x16x33xf32> to vector<2x16x17xf32>
    %88 = tpu.concatenate %87, %86 in 2 : vector<2x16x17xf32>, vector<2x16x16xf32> -> vector<2x16x33xf32>
    %89 = arith.minimumf %85, %88 : vector<2x16x33xf32>
    %cst_26 = arith.constant 0x7F800000 : f32
    %90 = vector.broadcast %cst_26 : f32 to vector<2x16x3xf32>
    %91 = vector.extract_strided_slice %89 {offsets = [0, 0, 3], sizes = [2, 16, 30], strides = [1, 1, 1]} : vector<2x16x33xf32> to vector<2x16x30xf32>
    %92 = tpu.concatenate %91, %90 in 2 : vector<2x16x30xf32>, vector<2x16x3xf32> -> vector<2x16x33xf32>
    %93 = arith.minimumf %89, %92 : vector<2x16x33xf32>
    %94 = vector.extract_strided_slice %93 {offsets = [0, 0, 0], sizes = [2, 16, 16], strides = [1, 1, 1]} : vector<2x16x33xf32> to vector<2x16x16xf32>
    %cst_27 = arith.constant 0x7F800000 : f32
    %95 = vector.broadcast %cst_27 : f32 to vector<2x17x16xf32>
    %96 = tpu.concatenate %95, %94 in 1 : vector<2x17x16xf32>, vector<2x16x16xf32> -> vector<2x33x16xf32>
    %cst_28 = arith.constant 0x7F800000 : f32
    %97 = vector.broadcast %cst_28 : f32 to vector<2x1x16xf32>
    %98 = vector.extract_strided_slice %96 {offsets = [0, 1, 0], sizes = [2, 32, 16], strides = [1, 1, 1]} : vector<2x33x16xf32> to vector<2x32x16xf32>
    %99 = tpu.concatenate %98, %97 in 1 : vector<2x32x16xf32>, vector<2x1x16xf32> -> vector<2x33x16xf32>
    %100 = arith.minimumf %96, %99 : vector<2x33x16xf32>
    %cst_29 = arith.constant 0x7F800000 : f32
    %101 = vector.broadcast %cst_29 : f32 to vector<2x2x16xf32>
    %102 = vector.extract_strided_slice %100 {offsets = [0, 2, 0], sizes = [2, 31, 16], strides = [1, 1, 1]} : vector<2x33x16xf32> to vector<2x31x16xf32>
    %103 = tpu.concatenate %102, %101 in 1 : vector<2x31x16xf32>, vector<2x2x16xf32> -> vector<2x33x16xf32>
    %104 = arith.minimumf %100, %103 : vector<2x33x16xf32>
    %cst_30 = arith.constant 0x7F800000 : f32
    %105 = vector.broadcast %cst_30 : f32 to vector<2x4x16xf32>
    %106 = vector.extract_strided_slice %104 {offsets = [0, 4, 0], sizes = [2, 29, 16], strides = [1, 1, 1]} : vector<2x33x16xf32> to vector<2x29x16xf32>
    %107 = tpu.concatenate %106, %105 in 1 : vector<2x29x16xf32>, vector<2x4x16xf32> -> vector<2x33x16xf32>
    %108 = arith.minimumf %104, %107 : vector<2x33x16xf32>
    %cst_31 = arith.constant 0x7F800000 : f32
    %109 = vector.broadcast %cst_31 : f32 to vector<2x8x16xf32>
    %110 = vector.extract_strided_slice %108 {offsets = [0, 8, 0], sizes = [2, 25, 16], strides = [1, 1, 1]} : vector<2x33x16xf32> to vector<2x25x16xf32>
    %111 = tpu.concatenate %110, %109 in 1 : vector<2x25x16xf32>, vector<2x8x16xf32> -> vector<2x33x16xf32>
    %112 = arith.minimumf %108, %111 : vector<2x33x16xf32>
    %cst_32 = arith.constant 0x7F800000 : f32
    %113 = vector.broadcast %cst_32 : f32 to vector<2x16x16xf32>
    %114 = vector.extract_strided_slice %112 {offsets = [0, 16, 0], sizes = [2, 17, 16], strides = [1, 1, 1]} : vector<2x33x16xf32> to vector<2x17x16xf32>
    %115 = tpu.concatenate %114, %113 in 1 : vector<2x17x16xf32>, vector<2x16x16xf32> -> vector<2x33x16xf32>
    %116 = arith.minimumf %112, %115 : vector<2x33x16xf32>
    %cst_33 = arith.constant 0x7F800000 : f32
    %117 = vector.broadcast %cst_33 : f32 to vector<2x3x16xf32>
    %118 = vector.extract_strided_slice %116 {offsets = [0, 3, 0], sizes = [2, 30, 16], strides = [1, 1, 1]} : vector<2x33x16xf32> to vector<2x30x16xf32>
    %119 = tpu.concatenate %118, %117 in 1 : vector<2x30x16xf32>, vector<2x3x16xf32> -> vector<2x33x16xf32>
    %120 = arith.minimumf %116, %119 : vector<2x33x16xf32>
    %121 = vector.extract_strided_slice %120 {offsets = [0, 0, 0], sizes = [2, 16, 16], strides = [1, 1, 1]} : vector<2x33x16xf32> to vector<2x16x16xf32>
    %122 = arith.subf %60, %121 : vector<2x16x16xf32>
    %123 = math.absf %122 : vector<2x16x16xf32>
    %124 = vector.shape_cast %123 : vector<2x16x16xf32> to vector<1x2x16x16xf32>
    %cst_34 = arith.constant dense<0.000000e+00> : vector<1xf32>
    %125 = vector.multi_reduction <add>, %124, %cst_34 [1, 2, 3] : vector<1x2x16x16xf32> to vector<1xf32>
    %126 = vector.shape_cast %125 : vector<1xf32> to vector<1x1x1x1xf32>
    %127 = vector.extract %126[0, 0, 0, 0] : f32 from vector<1x1x1x1xf32>
    %128 = vector.broadcast %127 : f32 to vector<1x8x128xf32>
    %c0_35 = arith.constant 0 : index
    %c0_36 = arith.constant 0 : index
    %c0_37 = arith.constant 0 : index
    %129 = vector.load %arg3[%c0_35, %c0_36, %c0_37] : memref<1x8x128xf32, #tpu.memory_space<vmem>>, vector<1x8x128xf32>
    tpu.vector_store %arg3[%c0_35, %c0_36, %c0_37], %128 {strides = array<i32>} : memref<1x8x128xf32, #tpu.memory_space<vmem>>, vector<1x8x128xf32>,
    return
  }
  func.func @transform_0(%arg0: i32) -> (i32, i32, i32, i32) {
    %c0_i32 = arith.constant 0 : i32
    %c0_i32_0 = arith.constant 0 : i32
    %c0_i32_1 = arith.constant 0 : i32
    %c0_i32_2 = arith.constant 0 : i32
    return %arg0, %c0_i32, %c0_i32_0, %c0_i32_1 : i32, i32, i32, i32
  }
  func.func @transform_1(%arg0: i32) -> (i32, i32, i32, i32) {
    %c0_i32 = arith.constant 0 : i32
    %c0_i32_0 = arith.constant 0 : i32
    %c0_i32_1 = arith.constant 0 : i32
    %c0_i32_2 = arith.constant 0 : i32
    return %arg0, %c0_i32, %c0_i32_0, %c0_i32_1 : i32, i32, i32, i32
  }
  func.func @transform_2(%arg0: i32) -> (i32, i32, i32) {
    %c0_i32 = arith.constant 0 : i32
    %c0_i32_0 = arith.constant 0 : i32
    %c0_i32_1 = arith.constant 0 : i32
    return %arg0, %c0_i32, %c0_i32_0 : i32, i32, i32
  }
}

</mosaic_0001>

<llo_original>
// kernel: tpu_custom_call.1
$region0: #{tpu_custom_call.1}
  #allocation0 [shape = 'u32[]', space=smem, size = 0x4, offset = 0x4, fixed_abs, tag = 'smem constant byte address 0x4 - core index']
  #allocation1 [shape = 'u32[144,128]{1,0:T(1,128)}', space=vmem, size = 0x12000, scoped, tag = 'internal scratch']
  %s0 = inlined_call_operand.hbm [shape: f32[2,4,16,16], index: 0, kind: input, shape index: {}]
  %s1 = inlined_call_operand.hbm [shape: f32[2,4,16,16], index: 1, kind: input, shape index: {}]
  %s2 = inlined_call_operand.hbm [shape: f32[2,8,128], index: 2, kind: output, shape index: {}]
  %s3 = sld [smem:[#allocation0]]
  $region49: #{tpu_custom_call.1} parent=0
    _
  %s5 = ssub.s32 1, %s3
  %s6 = scalar_select 0, %s5, %s3
  $region1: #{tpu_custom_call.1} parent=0
    #allocation2 [shape = 'u8[65536]{0}', space=vmem, size = 0x10000, scoped, tag = 'input window, operand 0']
    #allocation3 [shape = 's32[2]{0}', space=sflag, size = 0x8, scoped, tag = 'scoped memory for tpu_custom_call.1']
    #allocation4 [shape = 's32[2]{0}', space=sflag, size = 0x8, scoped, tag = 'scoped memory for tpu_custom_call.1']
    #allocation5 [shape = 'u8[65536]{0}', space=vmem, size = 0x10000, scoped, tag = 'input window, operand 1']
    #allocation6 [shape = 's32[2]{0}', space=sflag, size = 0x8, scoped, tag = 'scoped memory for tpu_custom_call.1']
    #allocation7 [shape = 'u8[8192]{0}', space=vmem, size = 0x2000, scoped, tag = 'output window, operand 0']
    %7 = vsyncpa [#allocation3], 0
    %s8 = scalar_lea.sflag [#allocation3], 1
    %9 = vsyncpa %s8, 0
    %10 = vsyncpa [#allocation6], 0
    %s11 = scalar_lea.sflag [#allocation6], 1
    %12 = vsyncpa %s11, 0
    %13 = vsyncpa [#allocation4], 0
    %s14 = scalar_lea.sflag [#allocation4], 1
    %15 = vsyncpa %s14, 0
    loop: start=0, step=1, limit=4
    $region2: #{tpu_custom_call.1} parent=1 // loop_pre_header
      _
    $region3: #{tpu_custom_call.1} parent=1 // loop_header
      %s17 = sphi 0, %s21
      %p18 = scmp.ge.s32.totalorder %s17, 4
      %s27 = sphi 0, %s29
      %s30 = sphi 0, %s27
      %s31 = sphi 0, %s30
      %s47 = sphi 0, %s31
      %s53 = sphi 0, %s55
      %s56 = sphi 0, %s53
      %s57 = sphi 0, %s56
      %s73 = sphi 0, %s57
      %s79 = sphi 0, %s81
      %s82 = sphi 0, %s79
      %s83 = sphi 0, %s82
      %s99 = sphi 0, %s83
    $region4: #{tpu_custom_call.1} parent=1 // loop_header_branch
      %20 = sbr.rel (%p18) target = $region8
    $region5: #{tpu_custom_call.1} parent=1 // loop_body
      %s22 = ssub.s32 %s17, 1
      %s23 = ssub.s32 %s17, 2
      %s24 = sadd.s32 %s17, 1
      %s25 = ssub.s32 %s17, %s24
      %p26 = scmp.eq.s32.totalorder %s25, 0
      %s28 = sadd.s32 %s27, 1
      %s29 = scalar_select %p26, %s27, %s28
      %p32 = pneg %p26
      %p33 = scmp.eq.s32.totalorder %s17, 1
      %p34 = por %p32, %p33
      %p35 = scmp.ne.s32.totalorder %s27, %s30
      %p36 = scmp.eq.s32.totalorder %s17, 0
      %p37 = por %p35, %p36
      %p38 = scmp.ne.s32.totalorder %s27, %s30
      %p39 = scmp.eq.s32.totalorder %s22, 1
      %p40 = por %p38, %p39
      %p41 = scmp.ne.s32.totalorder %s30, %s31
      %p42 = scmp.eq.s32.totalorder %s22, 0
      %p43 = por %p41, %p42
      %p44 = scmp.ne.s32.totalorder %s30, %s31
      %p45 = scmp.eq.s32.totalorder %s23, 1
      %p46 = por %p44, %p45
      %p48 = scmp.ne.s32.totalorder %s31, %s47
      %p49 = scmp.eq.s32.totalorder %s23, 0
      %p50 = por %p48, %p49
      %s51 = ssub.s32 %s17, %s24
      %p52 = scmp.eq.s32.totalorder %s51, 0
      %s54 = sadd.s32 %s53, 1
      %s55 = scalar_select %p52, %s53, %s54
      %p58 = pneg %p52
      %p59 = scmp.eq.s32.totalorder %s17, 1
      %p60 = por %p58, %p59
      %p61 = scmp.ne.s32.totalorder %s53, %s56
      %p62 = scmp.eq.s32.totalorder %s17, 0
      %p63 = por %p61, %p62
      %p64 = scmp.ne.s32.totalorder %s53, %s56
      %p65 = scmp.eq.s32.totalorder %s22, 1
      %p66 = por %p64, %p65
      %p67 = scmp.ne.s32.totalorder %s56, %s57
      %p68 = scmp.eq.s32.totalorder %s22, 0
      %p69 = por %p67, %p68
      %p70 = scmp.ne.s32.totalorder %s56, %s57
      %p71 = scmp.eq.s32.totalorder %s23, 1
      %p72 = por %p70, %p71
      %p74 = scmp.ne.s32.totalorder %s57, %s73
      %p75 = scmp.eq.s32.totalorder %s23, 0
      %p76 = por %p74, %p75
      %s77 = ssub.s32 %s17, %s24
      %p78 = scmp.eq.s32.totalorder %s77, 0
      %s80 = sadd.s32 %s79, 1
      %s81 = scalar_select %p78, %s79, %s80
      %p84 = pneg %p78
      %p85 = scmp.eq.s32.totalorder %s17, 1
      %p86 = por %p84, %p85
      %p87 = scmp.ne.s32.totalorder %s79, %s82
      %p88 = scmp.eq.s32.totalorder %s17, 0
      %p89 = por %p87, %p88
      %p90 = scmp.ne.s32.totalorder %s79, %s82
      %p91 = scmp.eq.s32.totalorder %s22, 1
      %p92 = por %p90, %p91
      %p93 = scmp.ne.s32.totalorder %s82, %s83
      %p94 = scmp.eq.s32.totalorder %s22, 0
      %p95 = por %p93, %p94
      %p96 = scmp.ne.s32.totalorder %s82, %s83
      %p97 = scmp.eq.s32.totalorder %s23, 1
      %p98 = por %p96, %p97
      %p100 = scmp.ne.s32.totalorder %s83, %s99
      %p101 = scmp.eq.s32.totalorder %s23, 0
      %p102 = por %p100, %p101
      %p103 = scmp.le.s32.totalorder 1, %s17
      %p104 = scmp.lt.s32.totalorder %s17, 3
      %p105 = pnand %p103, %p104
      %p106 = pneg %p105
      // Predicated region
      $region9: #{tpu_custom_call.1} parent=5 // pred_check
        _
      $region10: #{tpu_custom_call.1} parent=5 // pred_check_branch
        %108 = sbr.rel (%p105) target = $region12
      $region11: #{tpu_custom_call.1} parent=5 // pred_region
        %s109 = ssub.s32 %s17, 1
      $region12: #{tpu_custom_call.1} parent=5 // pred_fallthru
        _
      %p110 = scmp.lt.s32.totalorder %s17, 2
      // Predicated region
      $region13: #{tpu_custom_call.1} parent=5 // pred_check
        %p111 = pneg %p110
      $region14: #{tpu_custom_call.1} parent=5 // pred_check_branch
        %113 = sbr.rel (%p111) target = $region16
      $region15: #{tpu_custom_call.1} parent=5 // pred_region
        // Predicated region
        $region17: #{tpu_custom_call.1} parent=15 // pred_check
          %p114 = pneg %p37
        $region18: #{tpu_custom_call.1} parent=15 // pred_check_branch
          %116 = sbr.rel (%p114) target = $region20
        $region19: #{tpu_custom_call.1} parent=15 // pred_region
          %s117 = sand.u32 %s27, 1
          %s118 = scalar_lea.sflag [#allocation3], %s117
          %s119 = sand.u32 %s27, 1
          %s120 = smul.addr %s119, 64
          %s121 = scalar_lea.vmem [#allocation2], %s120
          %s123 = ssub.s32 1024, 1024
          %124 = vsyncadd %s118, %s123
          %s125 = smul.addr %s17, 8
          %s126 = smul.addr %s125, 128
          %s127 = scalar_lea.hbm %s0, %s126
          %s128 = sshll.u32 %s121, 4
          %s129 = int_to_ptr.vmem [resolvable:$true] %s128
          %134 = dma.hbm_to_vmem [thread:$0]  %s127, 1024, %s129, %s118, 128, 128, 8
        $region20: #{tpu_custom_call.1} parent=15 // pred_fallthru
          _
        // Predicated region
        $region21: #{tpu_custom_call.1} parent=15 // pred_check
          %p135 = pneg %p63
        $region22: #{tpu_custom_call.1} parent=15 // pred_check_branch
          %137 = sbr.rel (%p135) target = $region24
        $region23: #{tpu_custom_call.1} parent=15 // pred_region
          %s138 = sand.u32 %s53, 1
          %s139 = scalar_lea.sflag [#allocation6], %s138
          %s140 = sand.u32 %s53, 1
          %s141 = smul.addr %s140, 64
          %s142 = scalar_lea.vmem [#allocation5], %s141
          %s144 = ssub.s32 1024, 1024
          %145 = vsyncadd %s139, %s144
          %s146 = smul.addr %s17, 8
          %s147 = smul.addr %s146, 128
          %s148 = scalar_lea.hbm %s1, %s147
          %s149 = sshll.u32 %s142, 4
          %s150 = int_to_ptr.vmem [resolvable:$true] %s149
          %155 = dma.hbm_to_vmem [thread:$0]  %s148, 1024, %s150, %s139, 128, 128, 8
        $region24: #{tpu_custom_call.1} parent=15 // pred_fallthru
          _
      $region16: #{tpu_custom_call.1} parent=5 // pred_fallthru
        _
      %p156 = scmp.le.s32.totalorder 1, %s17
      %p157 = scmp.lt.s32.totalorder %s17, 3
      %p158 = pnand %p156, %p157
      %p159 = pneg %p158
      // Predicated region
      $region25: #{tpu_custom_call.1} parent=5 // pred_check
        _
      $region26: #{tpu_custom_call.1} parent=5 // pred_check_branch
        %161 = sbr.rel (%p158) target = $region28
      $region27: #{tpu_custom_call.1} parent=5 // pred_region
        %s162 = ssub.s32 %s17, 1
        %s163 = sand.u32 %s30, 1
        %s164 = scalar_lea.sflag [#allocation3], %s163
        %s165 = sand.u32 %s30, 1
        %s166 = smul.addr %s165, 64
        %s167 = scalar_lea.vmem [#allocation2], %s166
        // Predicated region
        $region29: #{tpu_custom_call.1} parent=27 // pred_check
          %p168 = pneg %p43
        $region30: #{tpu_custom_call.1} parent=27 // pred_check_branch
          %170 = sbr.rel (%p168) target = $region32
        $region31: #{tpu_custom_call.1} parent=27 // pred_region
          %171 = dma.done %s164, 1024
        $region32: #{tpu_custom_call.1} parent=27 // pred_fallthru
          _
        %s172 = sand.u32 %s56, 1
        %s173 = scalar_lea.sflag [#allocation6], %s172
        %s174 = sand.u32 %s56, 1
        %s175 = smul.addr %s174, 64
        %s176 = scalar_lea.vmem [#allocation5], %s175
        // Predicated region
        $region33: #{tpu_custom_call.1} parent=27 // pred_check
          %p177 = pneg %p69
        $region34: #{tpu_custom_call.1} parent=27 // pred_check_branch
          %179 = sbr.rel (%p177) target = $region36
        $region35: #{tpu_custom_call.1} parent=27 // pred_region
          %180 = dma.done %s173, 1024
        $region36: #{tpu_custom_call.1} parent=27 // pred_fallthru
          _
        %s181 = sand.u32 %s30, 1
        %s182 = scalar_lea.sflag [#allocation3], %s181
        %s183 = sand.u32 %s30, 1
        %s184 = smul.addr %s183, 64
        %s185 = scalar_lea.vmem [#allocation2], %s184
        %p186 = pneg %p43
        %p187 = pneg %p40
        %s188 = sand.u32 %s56, 1
        %s189 = scalar_lea.sflag [#allocation6], %s188
        %s190 = sand.u32 %s56, 1
        %s191 = smul.addr %s190, 64
        %s192 = scalar_lea.vmem [#allocation5], %s191
        %p193 = pneg %p69
        %p194 = pneg %p66
        %p195 = pneg %p95
        %p196 = pneg %p92
        %s197 = sand.u32 %s82, 1
        %s198 = scalar_lea.sflag [#allocation4], %s197
        %s199 = sand.u32 %s82, 1
        %s200 = smul.addr %s199, 8
        %s201 = scalar_lea.vmem [#allocation7], %s200
        %v202 = vld [vmem:[%s167] sm:$0xff]
        %v203 = vld [vmem:[%s167 + $0x8] sm:$0xff]
        %v204 = vld [vmem:[%s167 + $0x10] sm:$0xff]
        %v205 = vld [vmem:[%s167 + $0x18] sm:$0xff]
        %v206 = vld [vmem:[%s167 + $0x20] sm:$0xff]
        %v207 = vld [vmem:[%s167 + $0x28] sm:$0xff]
        %v208 = vld [vmem:[%s167 + $0x30] sm:$0xff]
        %v209 = vld [vmem:[%s167 + $0x38] sm:$0xff]
        %v210 = vmin.f32 %v202, %v204
        %v211 = vmin.f32 %v203, %v205
        %v212 = vmin.f32 %v204, %v206
        %v213 = vmin.f32 %v205, %v207
        %v214 = vmin.f32 %v210, %v206
        %v215 = vmin.f32 %v211, %v207
        %v216 = vmin.f32 %v212, %v208
        %v217 = vmin.f32 %v213, %v209
        %222 = vrot.lane.b32.xlu0 %v214, 17
        %v223 = vpop.permute.xlu0 %222
        %224 = vrot.lane.b32.xlu0 %v215, 17
        %v225 = vpop.permute.xlu0 %224
        %226 = vrot.lane.b32.xlu0 %v216, 17
        %v227 = vpop.permute.xlu0 %226
        %228 = vrot.lane.b32.xlu0 %v217, 17
        %v229 = vpop.permute.xlu0 %228
        %vm234 = vcmask 138240
        %v235 = vsel %vm234, inf, %v223
        %v236 = vsel %vm234, inf, %v225
        %v237 = vsel %vm234, inf, %v227
        %v238 = vsel %vm234, inf, %v229
        %243 = vrot.lane.b32.xlu0 %v235, 127
        %v244 = vpop.permute.xlu0 %243
        %245 = vrot.lane.b32.xlu0 %v236, 127
        %v246 = vpop.permute.xlu0 %245
        %247 = vrot.lane.b32.xlu0 %v237, 127
        %v248 = vpop.permute.xlu0 %247
        %249 = vrot.lane.b32.xlu0 %v238, 127
        %v250 = vpop.permute.xlu0 %249
        %vm255 = vcmask 261120
        %v256 = vsel %vm255, %v244, inf
        %v257 = vsel %vm255, %v246, inf
        %v258 = vsel %vm255, %v248, inf
        %v259 = vsel %vm255, %v250, inf
        %v260 = vmin.f32 %v235, %v256
        %v261 = vmin.f32 %v236, %v257
        %v262 = vmin.f32 %v237, %v258
        %v263 = vmin.f32 %v238, %v259
        %268 = vrot.lane.b32.xlu0 %v260, 126
        %v269 = vpop.permute.xlu0 %268
        %270 = vrot.lane.b32.xlu0 %v261, 126
        %v271 = vpop.permute.xlu0 %270
        %272 = vrot.lane.b32.xlu0 %v262, 126
        %v273 = vpop.permute.xlu0 %272
        %274 = vrot.lane.b32.xlu0 %v263, 126
        %v275 = vpop.permute.xlu0 %274
        %vm280 = vcmask 252928
        %v281 = vsel %vm280, %v269, inf
        %v282 = vsel %vm280, %v271, inf
        %v283 = vsel %vm280, %v273, inf
        %v284 = vsel %vm280, %v275, inf
        %v285 = vmin.f32 %v260, %v281
        %v286 = vmin.f32 %v261, %v282
        %v287 = vmin.f32 %v262, %v283
        %v288 = vmin.f32 %v263, %v284
        %293 = vrot.lane.b32.xlu0 %v285, 124
        %v294 = vpop.permute.xlu0 %293
        %295 = vrot.lane.b32.xlu0 %v286, 124
        %v296 = vpop.permute.xlu0 %295
        %297 = vrot.lane.b32.xlu0 %v287, 124
        %v298 = vpop.permute.xlu0 %297
        %299 = vrot.lane.b32.xlu0 %v288, 124
        %v300 = vpop.permute.xlu0 %299
        %vm305 = vcmask 236544
        %v306 = vsel %vm305, %v294, inf
        %v307 = vsel %vm305, %v296, inf
        %v308 = vsel %vm305, %v298, inf
        %v309 = vsel %vm305, %v300, inf
        %v310 = vmin.f32 %v285, %v306
        %v311 = vmin.f32 %v286, %v307
        %v312 = vmin.f32 %v287, %v308
        %v313 = vmin.f32 %v288, %v309
        %318 = vrot.lane.b32.xlu0 %v310, 120
        %v319 = vpop.permute.xlu0 %318
        %320 = vrot.lane.b32.xlu0 %v311, 120
        %v321 = vpop.permute.xlu0 %320
        %322 = vrot.lane.b32.xlu0 %v312, 120
        %v323 = vpop.permute.xlu0 %322
        %324 = vrot.lane.b32.xlu0 %v313, 120
        %v325 = vpop.permute.xlu0 %324
        %vm330 = vcmask 203776
        %v331 = vsel %vm330, %v319, inf
        %v332 = vsel %vm330, %v321, inf
        %v333 = vsel %vm330, %v323, inf
        %v334 = vsel %vm330, %v325, inf
        %v335 = vmin.f32 %v310, %v331
        %v336 = vmin.f32 %v311, %v332
        %v337 = vmin.f32 %v312, %v333
        %v338 = vmin.f32 %v313, %v334
        %343 = vrot.lane.b32.xlu0 %v335, 112
        %v344 = vpop.permute.xlu0 %343
        %345 = vrot.lane.b32.xlu0 %v336, 112
        %v346 = vpop.permute.xlu0 %345
        %347 = vrot.lane.b32.xlu0 %v337, 112
        %v348 = vpop.permute.xlu0 %347
        %349 = vrot.lane.b32.xlu0 %v338, 112
        %v350 = vpop.permute.xlu0 %349
        %v355 = vsel %vm234, %v344, inf
        %v356 = vsel %vm234, %v346, inf
        %v357 = vsel %vm234, %v348, inf
        %v358 = vsel %vm234, %v350, inf
        %v359 = vmin.f32 %v335, %v355
        %v360 = vmin.f32 %v336, %v356
        %v361 = vmin.f32 %v337, %v357
        %v362 = vmin.f32 %v338, %v358
        %367 = vrot.lane.b32.xlu0 %v359, 125
        %v368 = vpop.permute.xlu0 %367
        %369 = vrot.lane.b32.xlu0 %v360, 125
        %v370 = vpop.permute.xlu0 %369
        %371 = vrot.lane.b32.xlu0 %v361, 125
        %v372 = vpop.permute.xlu0 %371
        %373 = vrot.lane.b32.xlu0 %v362, 125
        %v374 = vpop.permute.xlu0 %373
        %vm379 = vcmask 244736
        %v380 = vsel %vm379, %v368, inf
        %v381 = vsel %vm379, %v370, inf
        %v382 = vsel %vm379, %v372, inf
        %v383 = vsel %vm379, %v374, inf
        %v384 = vmin.f32 %v359, %v380
        %v385 = vmin.f32 %v360, %v381
        %v386 = vmin.f32 %v361, %v382
        %v387 = vmin.f32 %v362, %v383
        %vm392 = vcmask 1040384
        %v393 = vrot.slane %v384, 7
        %v394 = vrot.slane %v385, 7
        %v395 = vsel %vm392, %v393, %v394
        %v396 = vrot.slane %v386, 7
        %v397 = vrot.slane %v387, 7
        %v398 = vsel %vm392, %v396, %v397
        %v405 = vsel %vm392, inf, %v393
        %v406 = vsel %vm392, inf, %v396
        %vm410 = vcmask 1046528
        %v411 = vrot.slane inf, 1
        %v412 = vsel %vm410, %v411, %v411
        %v413 = vrot.slane %v405, 1
        %v414 = vsel %vm410, %v411, %v413
        %v415 = vrot.slane %v395, 1
        %v416 = vsel %vm410, %v413, %v415
        %v417 = vrot.slane %v394, 1
        %v418 = vsel %vm410, %v415, %v417
        %v419 = vrot.slane %v406, 1
        %v420 = vsel %vm410, %v411, %v419
        %v421 = vrot.slane %v398, 1
        %v422 = vsel %vm410, %v419, %v421
        %v423 = vrot.slane %v397, 1
        %v424 = vsel %vm410, %v421, %v423
        %v432 = vmin.f32 %v405, %v416
        %v433 = vmin.f32 %v395, %v418
        %v434 = vmin.f32 %v406, %v422
        %v435 = vmin.f32 %v398, %v424
        %vm440 = vcmask 1045504
        %v441 = vrot.slane %v412, 2
        %v442 = vrot.slane %v414, 2
        %v443 = vsel %vm440, %v441, %v442
        %v444 = vrot.slane %v432, 2
        %v445 = vsel %vm440, %v442, %v444
        %v446 = vrot.slane %v433, 2
        %v447 = vsel %vm440, %v444, %v446
        %v448 = vrot.slane %v394, 2
        %v449 = vsel %vm440, %v446, %v448
        %v450 = vrot.slane %v420, 2
        %v451 = vsel %vm440, %v441, %v450
        %v452 = vrot.slane %v434, 2
        %v453 = vsel %vm440, %v450, %v452
        %v454 = vrot.slane %v435, 2
        %v455 = vsel %vm440, %v452, %v454
        %v456 = vrot.slane %v397, 2
        %v457 = vsel %vm440, %v454, %v456
        %v466 = vsel %vm410, %v449, inf
        %v467 = vsel %vm410, %v457, inf
        %v468 = vmin.f32 %v412, %v443
        %v469 = vmin.f32 %v414, %v445
        %v470 = vmin.f32 %v432, %v447
        %v471 = vmin.f32 %v433, %v466
        %v472 = vmin.f32 %v412, %v451
        %v473 = vmin.f32 %v420, %v453
        %v474 = vmin.f32 %v434, %v455
        %v475 = vmin.f32 %v435, %v467
        %vm484 = vcmask 1043456
        %v485 = vrot.slane %v468, 4
        %v486 = vrot.slane %v469, 4
        %v487 = vsel %vm484, %v485, %v486
        %v488 = vrot.slane %v470, 4
        %v489 = vsel %vm484, %v486, %v488
        %v490 = vrot.slane %v471, 4
        %v491 = vsel %vm484, %v488, %v490
        %v492 = vrot.slane %v394, 4
        %v493 = vsel %vm484, %v490, %v492
        %v494 = vrot.slane %v472, 4
        %v495 = vrot.slane %v473, 4
        %v496 = vsel %vm484, %v494, %v495
        %v497 = vrot.slane %v474, 4
        %v498 = vsel %vm484, %v495, %v497
        %v499 = vrot.slane %v475, 4
        %v500 = vsel %vm484, %v497, %v499
        %v501 = vrot.slane %v397, 4
        %v502 = vsel %vm484, %v499, %v501
        %vm511 = vcmask 1044480
        %v512 = vsel %vm511, %v493, inf
        %v513 = vsel %vm511, %v502, inf
        %v514 = vmin.f32 %v468, %v487
        %v515 = vmin.f32 %v469, %v489
        %v516 = vmin.f32 %v470, %v491
        %v517 = vmin.f32 %v471, %v512
        %v518 = vmin.f32 %v472, %v496
        %v519 = vmin.f32 %v473, %v498
        %v520 = vmin.f32 %v474, %v500
        %v521 = vmin.f32 %v475, %v513
        %v522 = vsel %vm392, %v394, inf
        %v523 = vsel %vm392, %v397, inf
        %v524 = vmin.f32 %v514, %v515
        %v525 = vmin.f32 %v515, %v516
        %v526 = vmin.f32 %v516, %v517
        %v527 = vmin.f32 %v517, %v522
        %v528 = vmin.f32 %v518, %v519
        %v529 = vmin.f32 %v519, %v520
        %v530 = vmin.f32 %v520, %v521
        %v531 = vmin.f32 %v521, %v523
        %v532 = vmin.f32 %v524, %v526
        %v533 = vmin.f32 %v525, %v527
        %v534 = vmin.f32 %v526, %v522
        %v535 = vmin.f32 %v528, %v530
        %v536 = vmin.f32 %v529, %v531
        %v537 = vmin.f32 %v530, %v523
        %v544 = vrot.slane %v532, 3
        %v545 = vrot.slane %v533, 3
        %v546 = vsel %vm511, %v544, %v545
        %v547 = vrot.slane %v534, 3
        %v548 = vsel %vm511, %v545, %v547
        %v549 = vrot.slane %v535, 3
        %v550 = vrot.slane %v536, 3
        %v551 = vsel %vm511, %v549, %v550
        %v552 = vrot.slane %v537, 3
        %v553 = vsel %vm511, %v550, %v552
        %v558 = vmin.f32 %v532, %v546
        %v559 = vmin.f32 %v533, %v548
        %v560 = vmin.f32 %v535, %v551
        %v561 = vmin.f32 %v536, %v553
        %v562 = vld [vmem:[%s176] sm:$0xff]
        %v563 = vld [vmem:[%s176 + $0x8] sm:$0xff]
        %v564 = vld [vmem:[%s176 + $0x10] sm:$0xff]
        %v565 = vld [vmem:[%s176 + $0x18] sm:$0xff]
        %v566 = vld [vmem:[%s176 + $0x20] sm:$0xff]
        %v567 = vld [vmem:[%s176 + $0x28] sm:$0xff]
        %v568 = vld [vmem:[%s176 + $0x30] sm:$0xff]
        %v569 = vld [vmem:[%s176 + $0x38] sm:$0xff]
        %v570 = vmin.f32 %v562, %v564
        %v571 = vmin.f32 %v563, %v565
        %v572 = vmin.f32 %v564, %v566
        %v573 = vmin.f32 %v565, %v567
        %v574 = vmin.f32 %v570, %v566
        %v575 = vmin.f32 %v571, %v567
        %v576 = vmin.f32 %v572, %v568
        %v577 = vmin.f32 %v573, %v569
        %582 = vrot.lane.b32.xlu0 %v574, 17
        %v583 = vpop.permute.xlu0 %582
        %584 = vrot.lane.b32.xlu0 %v575, 17
        %v585 = vpop.permute.xlu0 %584
        %586 = vrot.lane.b32.xlu0 %v576, 17
        %v587 = vpop.permute.xlu0 %586
        %588 = vrot.lane.b32.xlu0 %v577, 17
        %v589 = vpop.permute.xlu0 %588
        %v594 = vsel %vm234, inf, %v583
        %v595 = vsel %vm234, inf, %v585
        %v596 = vsel %vm234, inf, %v587
        %v597 = vsel %vm234, inf, %v589
        %602 = vrot.lane.b32.xlu0 %v594, 127
        %v603 = vpop.permute.xlu0 %602
        %604 = vrot.lane.b32.xlu0 %v595, 127
        %v605 = vpop.permute.xlu0 %604
        %606 = vrot.lane.b32.xlu0 %v596, 127
        %v607 = vpop.permute.xlu0 %606
        %608 = vrot.lane.b32.xlu0 %v597, 127
        %v609 = vpop.permute.xlu0 %608
        %v614 = vsel %vm255, %v603, inf
        %v615 = vsel %vm255, %v605, inf
        %v616 = vsel %vm255, %v607, inf
        %v617 = vsel %vm255, %v609, inf
        %v618 = vmin.f32 %v594, %v614
        %v619 = vmin.f32 %v595, %v615
        %v620 = vmin.f32 %v596, %v616
        %v621 = vmin.f32 %v597, %v617
        %626 = vrot.lane.b32.xlu0 %v618, 126
        %v627 = vpop.permute.xlu0 %626
        %628 = vrot.lane.b32.xlu0 %v619, 126
        %v629 = vpop.permute.xlu0 %628
        %630 = vrot.lane.b32.xlu0 %v620, 126
        %v631 = vpop.permute.xlu0 %630
        %632 = vrot.lane.b32.xlu0 %v621, 126
        %v633 = vpop.permute.xlu0 %632
        %v638 = vsel %vm280, %v627, inf
        %v639 = vsel %vm280, %v629, inf
        %v640 = vsel %vm280, %v631, inf
        %v641 = vsel %vm280, %v633, inf
        %v642 = vmin.f32 %v618, %v638
        %v643 = vmin.f32 %v619, %v639
        %v644 = vmin.f32 %v620, %v640
        %v645 = vmin.f32 %v621, %v641
        %650 = vrot.lane.b32.xlu0 %v642, 124
        %v651 = vpop.permute.xlu0 %650
        %652 = vrot.lane.b32.xlu0 %v643, 124
        %v653 = vpop.permute.xlu0 %652
        %654 = vrot.lane.b32.xlu0 %v644, 124
        %v655 = vpop.permute.xlu0 %654
        %656 = vrot.lane.b32.xlu0 %v645, 124
        %v657 = vpop.permute.xlu0 %656
        %v662 = vsel %vm305, %v651, inf
        %v663 = vsel %vm305, %v653, inf
        %v664 = vsel %vm305, %v655, inf
        %v665 = vsel %vm305, %v657, inf
        %v666 = vmin.f32 %v642, %v662
        %v667 = vmin.f32 %v643, %v663
        %v668 = vmin.f32 %v644, %v664
        %v669 = vmin.f32 %v645, %v665
        %674 = vrot.lane.b32.xlu0 %v666, 120
        %v675 = vpop.permute.xlu0 %674
        %676 = vrot.lane.b32.xlu0 %v667, 120
        %v677 = vpop.permute.xlu0 %676
        %678 = vrot.lane.b32.xlu0 %v668, 120
        %v679 = vpop.permute.xlu0 %678
        %680 = vrot.lane.b32.xlu0 %v669, 120
        %v681 = vpop.permute.xlu0 %680
        %v686 = vsel %vm330, %v675, inf
        %v687 = vsel %vm330, %v677, inf
        %v688 = vsel %vm330, %v679, inf
        %v689 = vsel %vm330, %v681, inf
        %v690 = vmin.f32 %v666, %v686
        %v691 = vmin.f32 %v667, %v687
        %v692 = vmin.f32 %v668, %v688
        %v693 = vmin.f32 %v669, %v689
        %698 = vrot.lane.b32.xlu0 %v690, 112
        %v699 = vpop.permute.xlu0 %698
        %700 = vrot.lane.b32.xlu0 %v691, 112
        %v701 = vpop.permute.xlu0 %700
        %702 = vrot.lane.b32.xlu0 %v692, 112
        %v703 = vpop.permute.xlu0 %702
        %704 = vrot.lane.b32.xlu0 %v693, 112
        %v705 = vpop.permute.xlu0 %704
        %v710 = vsel %vm234, %v699, inf
        %v711 = vsel %vm234, %v701, inf
        %v712 = vsel %vm234, %v703, inf
        %v713 = vsel %vm234, %v705, inf
        %v714 = vmin.f32 %v690, %v710
        %v715 = vmin.f32 %v691, %v711
        %v716 = vmin.f32 %v692, %v712
        %v717 = vmin.f32 %v693, %v713
        %722 = vrot.lane.b32.xlu0 %v714, 125
        %v723 = vpop.permute.xlu0 %722
        %724 = vrot.lane.b32.xlu0 %v715, 125
        %v725 = vpop.permute.xlu0 %724
        %726 = vrot.lane.b32.xlu0 %v716, 125
        %v727 = vpop.permute.xlu0 %726
        %728 = vrot.lane.b32.xlu0 %v717, 125
        %v729 = vpop.permute.xlu0 %728
        %v734 = vsel %vm379, %v723, inf
        %v735 = vsel %vm379, %v725, inf
        %v736 = vsel %vm379, %v727, inf
        %v737 = vsel %vm379, %v729, inf
        %v738 = vmin.f32 %v714, %v734
        %v739 = vmin.f32 %v715, %v735
        %v740 = vmin.f32 %v716, %v736
        %v741 = vmin.f32 %v717, %v737
        %v746 = vrot.slane %v738, 7
        %v747 = vrot.slane %v739, 7
        %v748 = vsel %vm392, %v746, %v747
        %v749 = vrot.slane %v740, 7
        %v750 = vrot.slane %v741, 7
        %v751 = vsel %vm392, %v749, %v750
        %v758 = vsel %vm392, inf, %v746
        %v759 = vsel %vm392, inf, %v749
        %v762 = vrot.slane %v758, 1
        %v763 = vsel %vm410, %v411, %v762
        %v764 = vrot.slane %v748, 1
        %v765 = vsel %vm410, %v762, %v764
        %v766 = vrot.slane %v747, 1
        %v767 = vsel %vm410, %v764, %v766
        %v768 = vrot.slane %v759, 1
        %v769 = vsel %vm410, %v411, %v768
        %v770 = vrot.slane %v751, 1
        %v771 = vsel %vm410, %v768, %v770
        %v772 = vrot.slane %v750, 1
        %v773 = vsel %vm410, %v770, %v772
        %v780 = vmin.f32 %v758, %v765
        %v781 = vmin.f32 %v748, %v767
        %v782 = vmin.f32 %v759, %v771
        %v783 = vmin.f32 %v751, %v773
        %v788 = vrot.slane %v763, 2
        %v789 = vsel %vm440, %v441, %v788
        %v790 = vrot.slane %v780, 2
        %v791 = vsel %vm440, %v788, %v790
        %v792 = vrot.slane %v781, 2
        %v793 = vsel %vm440, %v790, %v792
        %v794 = vrot.slane %v747, 2
        %v795 = vsel %vm440, %v792, %v794
        %v796 = vrot.slane %v769, 2
        %v797 = vsel %vm440, %v441, %v796
        %v798 = vrot.slane %v782, 2
        %v799 = vsel %vm440, %v796, %v798
        %v800 = vrot.slane %v783, 2
        %v801 = vsel %vm440, %v798, %v800
        %v802 = vrot.slane %v750, 2
        %v803 = vsel %vm440, %v800, %v802
        %v812 = vsel %vm410, %v795, inf
        %v813 = vsel %vm410, %v803, inf
        %v814 = vmin.f32 %v412, %v789
        %v815 = vmin.f32 %v763, %v791
        %v816 = vmin.f32 %v780, %v793
        %v817 = vmin.f32 %v781, %v812
        %v818 = vmin.f32 %v412, %v797
        %v819 = vmin.f32 %v769, %v799
        %v820 = vmin.f32 %v782, %v801
        %v821 = vmin.f32 %v783, %v813
        %v830 = vrot.slane %v814, 4
        %v831 = vrot.slane %v815, 4
        %v832 = vsel %vm484, %v830, %v831
        %v833 = vrot.slane %v816, 4
        %v834 = vsel %vm484, %v831, %v833
        %v835 = vrot.slane %v817, 4
        %v836 = vsel %vm484, %v833, %v835
        %v837 = vrot.slane %v747, 4
        %v838 = vsel %vm484, %v835, %v837
        %v839 = vrot.slane %v818, 4
        %v840 = vrot.slane %v819, 4
        %v841 = vsel %vm484, %v839, %v840
        %v842 = vrot.slane %v820, 4
        %v843 = vsel %vm484, %v840, %v842
        %v844 = vrot.slane %v821, 4
        %v845 = vsel %vm484, %v842, %v844
        %v846 = vrot.slane %v750, 4
        %v847 = vsel %vm484, %v844, %v846
        %v856 = vsel %vm511, %v838, inf
        %v857 = vsel %vm511, %v847, inf
        %v858 = vmin.f32 %v814, %v832
        %v859 = vmin.f32 %v815, %v834
        %v860 = vmin.f32 %v816, %v836
        %v861 = vmin.f32 %v817, %v856
        %v862 = vmin.f32 %v818, %v841
        %v863 = vmin.f32 %v819, %v843
        %v864 = vmin.f32 %v820, %v845
        %v865 = vmin.f32 %v821, %v857
        %v866 = vsel %vm392, %v747, inf
        %v867 = vsel %vm392, %v750, inf
        %v868 = vmin.f32 %v858, %v859
        %v869 = vmin.f32 %v859, %v860
        %v870 = vmin.f32 %v860, %v861
        %v871 = vmin.f32 %v861, %v866
        %v872 = vmin.f32 %v862, %v863
        %v873 = vmin.f32 %v863, %v864
        %v874 = vmin.f32 %v864, %v865
        %v875 = vmin.f32 %v865, %v867
        %v876 = vmin.f32 %v868, %v870
        %v877 = vmin.f32 %v869, %v871
        %v878 = vmin.f32 %v870, %v866
        %v879 = vmin.f32 %v872, %v874
        %v880 = vmin.f32 %v873, %v875
        %v881 = vmin.f32 %v874, %v867
        %v888 = vrot.slane %v876, 3
        %v889 = vrot.slane %v877, 3
        %v890 = vsel %vm511, %v888, %v889
        %v891 = vrot.slane %v878, 3
        %v892 = vsel %vm511, %v889, %v891
        %v893 = vrot.slane %v879, 3
        %v894 = vrot.slane %v880, 3
        %v895 = vsel %vm511, %v893, %v894
        %v896 = vrot.slane %v881, 3
        %v897 = vsel %vm511, %v894, %v896
        %v902 = vmin.f32 %v876, %v890
        %v903 = vmin.f32 %v877, %v892
        %v904 = vmin.f32 %v879, %v895
        %v905 = vmin.f32 %v880, %v897
        %v906 = vsub.f32 %v558, %v902
        %v907 = vsub.f32 %v559, %v903
        %v908 = vsub.f32 %v560, %v904
        %v909 = vsub.f32 %v561, %v905
        %v910 = vand.u32 2147483647, %v906
        %v911 = vand.u32 2147483647, %v907
        %v912 = vand.u32 2147483647, %v908
        %v913 = vand.u32 2147483647, %v909
        %vm914 = vcmask 130048
        %v915 = vsel %vm914, %v910, 0.0
        %v916 = vsel %vm914, %v911, 0.0
        %v917 = vadd.f32 %v915, %v916
        %v918 = vsel %vm914, %v912, 0.0
        %v919 = vadd.f32 %v917, %v918
        %v920 = vsel %vm914, %v913, 0.0
        %v921 = vadd.f32 %v919, %v920
        %922 = vadd.xlane.f32.xlu0 %v921
        %v923 = vpop.xlane.xlu0 %922
        %v924 = vrot.slane %v923, 4
        %v925 = vadd.f32 %v923, %v924
        %v926 = vrot.slane %v925, 2
        %v927 = vadd.f32 %v925, %v926
        %v928 = vrot.slane %v927, 1
        %v929 = vadd.f32 %v927, %v928
        %s930 = vtos %v929
        %v931 = vstv %s930
        %932 = vst [vmem:[%s201] sm:$0xff] %v931
        %s933 = sand.u32 %s82, 1
        %s934 = scalar_lea.sflag [#allocation4], %s933
        %s935 = sand.u32 %s82, 1
        %s936 = smul.addr %s935, 8
        %s937 = scalar_lea.vmem [#allocation7], %s936
        // Predicated region
        $region37: #{tpu_custom_call.1} parent=27 // pred_check
          %p938 = pneg %p92
        $region38: #{tpu_custom_call.1} parent=27 // pred_check_branch
          %940 = sbr.rel (%p938) target = $region40
        $region39: #{tpu_custom_call.1} parent=27 // pred_region
          %s942 = ssub.s32 128, 128
          %943 = vsyncadd %s934, %s942
          %s944 = smul.addr %s22, 128
          %s945 = scalar_lea.hbm %s2, %s944
          %s947 = sshll.u32 %s937, 4
          %s948 = int_to_ptr.vmem [resolvable:$true] %s947
          %950 = dma.vmem_to_hbm [thread:$0]  %s948, 128, %s945, %s934
        $region40: #{tpu_custom_call.1} parent=27 // pred_fallthru
          _
      $region28: #{tpu_custom_call.1} parent=5 // pred_fallthru
        _
      %p951 = scmp.le.s32.totalorder 2, %s17
      // Predicated region
      $region41: #{tpu_custom_call.1} parent=5 // pred_check
        %p952 = pneg %p951
      $region42: #{tpu_custom_call.1} parent=5 // pred_check_branch
        %954 = sbr.rel (%p952) target = $region44
      $region43: #{tpu_custom_call.1} parent=5 // pred_region
        %s955 = ssub.s32 %s17, 2
        // Predicated region
        $region45: #{tpu_custom_call.1} parent=43 // pred_check
          %p956 = pneg %p98
        $region46: #{tpu_custom_call.1} parent=43 // pred_check_branch
          %958 = sbr.rel (%p956) target = $region48
        $region47: #{tpu_custom_call.1} parent=43 // pred_region
          %s959 = sand.u32 %s83, 1
          %s960 = scalar_lea.sflag [#allocation4], %s959
          %s961 = sand.u32 %s83, 1
          %s962 = smul.addr %s961, 8
          %s963 = scalar_lea.vmem [#allocation7], %s962
          %964 = dma.done %s960, 128
        $region48: #{tpu_custom_call.1} parent=43 // pred_fallthru
          _
      $region44: #{tpu_custom_call.1} parent=5 // pred_fallthru
        _
    $region6: #{tpu_custom_call.1} parent=1 // loop_footer
      %s21 = sadd.s32 1, %s17
    $region7: #{tpu_custom_call.1} parent=1 // loop_footer_branch
      %16 = sbr.rel target = $region3
    $region8: #{tpu_custom_call.1} parent=1 // loop_exit
      _
    %965 = vsyncpa [#allocation3], 1
    %s966 = scalar_lea.sflag [#allocation3], 1
    %967 = vsyncpa %s966, 1
    %968 = vsyncpa [#allocation6], 1
    %s969 = scalar_lea.sflag [#allocation6], 1
    %970 = vsyncpa %s969, 1
    %971 = vsyncpa [#allocation4], 1
    %s972 = scalar_lea.sflag [#allocation4], 1
    %973 = vsyncpa %s972, 1

</llo_original>
